<compile_context>
chip_gen: v6e
topology: v6e:2x2x1
jax: 0.10.0
libtpu: 0.0.40
codegen_flags: <defaults>
</compile_context>

<pallas_src>
import functools

import jax
import jax.numpy as jnp
from jax.experimental import pallas as pl
from jax.experimental.pallas import tpu as pltpu


def _rmsnorm_kernel(x_ref, w_ref, o_ref, *, eps):
    # x_ref: (bm, H) input dtype; w_ref: (1, H) weight dtype; o_ref: (bm, H).
    x = x_ref[...].astype(jnp.float32)
    var = jnp.mean(x * x, axis=-1, keepdims=True)        # fp32 variance per row
    inv = jax.lax.rsqrt(var + eps)                        # fp32 rsqrt (EUP slot)
    w = w_ref[...].astype(jnp.float32)                    # single (1, H) row cast
    # Re-read + re-cast x so the fp32 reduction tile need not stay live here
    # (halves peak fp32 VMEM pressure for 16-bit inputs).
    xn = x_ref[...].astype(jnp.float32) * inv
    o_ref[...] = (w * xn).astype(o_ref.dtype)


def _round_up(x, m):
    return (x + m - 1) // m * m


def _dimension_semantics():
    # v7x has 2 TensorCores/chip; only CORE_PARALLEL actually splits the grid
    # across them. On single-TC chips (v5e/v6e) plain "parallel" is used.
    try:
        kind = jax.devices()[0].device_kind.lower()
    except Exception:
        return ("parallel",)
    if "v7" in kind or "7x" in kind:
        return (getattr(pltpu, "CORE_PARALLEL", "parallel"),)
    return ("parallel",)


def abq_llama_rmsnorm(hidden_states, weight, eps=1e-6, target_block_bytes=4 << 20):
    """hidden_states: [..., H]; weight: [H]. Returns same shape/dtype as input."""
    orig_shape = hidden_states.shape
    H = orig_shape[-1]
    x2d = hidden_states.reshape(-1, H)
    M = x2d.shape[0]

    itemsize = jnp.dtype(hidden_states.dtype).itemsize
    # Sublane packing: 1-byte dtypes pack 32 rows/vreg, 2-byte 16, 4-byte 8.
    row_align = {1: 32, 2: 16}.get(itemsize, 8)

    # Size the row tile by bytes (~target_block_bytes per input block), then
    # align and clamp to the (rounded-up) total row count.
    rows_target = max(1, target_block_bytes // (H * itemsize))
    bm = _round_up(rows_target, row_align)
    bm = min(bm, _round_up(M, row_align))
    grid_m = pl.cdiv(M, bm)   # masked partial last tile; rows are independent

    # VMEM budget: double-buffered in + out blocks, worst-case fp32 temporaries
    # inside the body, the resident weight row, plus margin. Cap at 48 MiB so
    # v7x (64 MiB physical) keeps headroom; still overrides v5e's 16 MiB default.
    in_block = bm * H * itemsize
    out_block = in_block
    f32_block = bm * H * 4
    w_bytes = _round_up(H * jnp.dtype(weight.dtype).itemsize, 1024)
    needed = 2 * in_block + 2 * out_block + 2 * f32_block + w_bytes + (2 << 20)
    vmem_limit = min(_round_up(needed, 1 << 20), 48 << 20)

    w2d = weight.reshape(1, H)   # keep original dtype; cast once inside kernel

    cost = pl.CostEstimate(
        flops=6 * M * H,
        transcendentals=M,
        bytes_accessed=2 * M * H * itemsize + H * jnp.dtype(weight.dtype).itemsize,
    )

    out = pl.pallas_call(
        functools.partial(_rmsnorm_kernel, eps=eps),
        out_shape=jax.ShapeDtypeStruct((M, H), hidden_states.dtype),
        grid_spec=pltpu.PrefetchScalarGridSpec(
            num_scalar_prefetch=0,
            grid=(grid_m,),
            in_specs=[
                pl.BlockSpec((bm, H), lambda i: (i, 0)),
                pl.BlockSpec((1, H), lambda i: (0, 0)),   # weight: resident
            ],
            out_specs=pl.BlockSpec((bm, H), lambda i: (i, 0)),
        ),
        compiler_params=pltpu.CompilerParams(
            dimension_semantics=_dimension_semantics(),
            vmem_limit_bytes=vmem_limit,
        ),
        cost_estimate=cost,
    )(x2d, w2d)
    return out.reshape(orig_shape)


def _reference(x, weight, eps):
    xf = x.astype(jnp.float32)
    var = jnp.mean(xf * xf, axis=-1, keepdims=True)
    return (weight.astype(jnp.float32) * (xf * jax.lax.rsqrt(var + eps))).astype(x.dtype)


if __name__ == "__main__":
    key = jax.random.PRNGKey(0)
    kx, kw, kx2 = jax.random.split(key, 3)

    batch, seq, hidden = 2, 8, 128
    eps = 1e-6
    x = jax.random.normal(kx, (batch, seq, hidden), dtype=jnp.float32).astype(jnp.bfloat16)
    # Deterministic "ori_norm.weight" init (shape [hidden]).
    weight = (1.0 + 0.01 * jax.random.normal(kw, (hidden,), dtype=jnp.float32)).astype(jnp.bfloat16)

    out = jax.block_until_ready(abq_llama_rmsnorm(x, weight, eps=eps))
    ref = _reference(x, weight, eps)
    assert out.shape == x.shape and out.dtype == x.dtype
    assert jnp.allclose(out.astype(jnp.float32), ref.astype(jnp.float32), atol=2e-2, rtol=2e-2)

    # Unaligned row count (M % row_align != 0) exercises the masked tail path.
    x2 = jax.random.normal(kx2, (5, hidden), dtype=jnp.float32).astype(jnp.bfloat16)
    out2 = jax.block_until_ready(abq_llama_rmsnorm(x2, weight, eps=eps))
    ref2 = _reference(x2, weight, eps)
    assert out2.shape == x2.shape and out2.dtype == x2.dtype
    assert jnp.allclose(out2.astype(jnp.float32), ref2.astype(jnp.float32), atol=2e-2, rtol=2e-2)

    print("KERNEL_OK")
</pallas_src>

<mosaic_0001>
module attributes {stable_mosaic.version = 11 : i64} {
  func.func @_rmsnorm_kernel(%arg0: i32, %arg1: memref<16x128xbf16, #tpu.memory_space<vmem>>, %arg2: memref<1x128xbf16, #tpu.memory_space<vmem>>, %arg3: memref<16x128xbf16, #tpu.memory_space<vmem>>) attributes {dimension_semantics = [#tpu.dimension_semantics<parallel>], iteration_bounds = array<i64: 1>, scalar_prefetch = 0 : i64, scratch_operands = 0 : i64, tpu.core_type = #tpu.core_type<tc>, window_params = [{transform_indices = @transform_0, window_bounds = array<i64: 16, 128>}, {pipeline_mode = #tpu.pipeline_mode<synchronous>, transform_indices = @transform_1, window_bounds = array<i64: 1, 128>}, {transform_indices = @transform_2, window_bounds = array<i64: 16, 128>}]} {
    %c0 = arith.constant 0 : index
    %c0_0 = arith.constant 0 : index
    %0 = vector.load %arg1[%c0, %c0_0] : memref<16x128xbf16, #tpu.memory_space<vmem>>, vector<16x128xbf16>
    %1 = arith.extf %0 : vector<16x128xbf16> to vector<16x128xf32>
    %2 = arith.mulf %1, %1 : vector<16x128xf32>
    %cst = arith.constant dense<0.000000e+00> : vector<16xf32>
    %3 = vector.multi_reduction <add>, %2, %cst [1] : vector<16x128xf32> to vector<16xf32>
    %4 = vector.shape_cast %3 : vector<16xf32> to vector<16x1xf32>
    %cst_1 = arith.constant 1.280000e+02 : f32
    %5 = vector.broadcast %cst_1 : f32 to vector<16x1xf32>
    %6 = arith.divf %4, %5 : vector<16x1xf32>
    %cst_2 = arith.constant 9.99999997E-7 : f32
    %7 = vector.broadcast %cst_2 : f32 to vector<16x1xf32>
    %8 = arith.addf %6, %7 : vector<16x1xf32>
    %9 = math.rsqrt %8 : vector<16x1xf32>
    %c0_3 = arith.constant 0 : index
    %c0_4 = arith.constant 0 : index
    %10 = vector.load %arg2[%c0_3, %c0_4] : memref<1x128xbf16, #tpu.memory_space<vmem>>, vector<1x128xbf16>
    %11 = arith.extf %10 : vector<1x128xbf16> to vector<1x128xf32>
    %c0_5 = arith.constant 0 : index
    %c0_6 = arith.constant 0 : index
    %12 = vector.load %arg1[%c0_5, %c0_6] : memref<16x128xbf16, #tpu.memory_space<vmem>>, vector<16x128xbf16>
    %13 = arith.extf %12 : vector<16x128xbf16> to vector<16x128xf32>
    %14 = vector.broadcast %9 : vector<16x1xf32> to vector<16x128xf32>
    %15 = arith.mulf %13, %14 : vector<16x128xf32>
    %16 = vector.broadcast %11 : vector<1x128xf32> to vector<16x128xf32>
    %17 = arith.mulf %16, %15 : vector<16x128xf32>
    %18 = arith.truncf %17 : vector<16x128xf32> to vector<16x128xbf16>
    %c0_7 = arith.constant 0 : index
    %c0_8 = arith.constant 0 : index
    %19 = vector.load %arg3[%c0_7, %c0_8] : memref<16x128xbf16, #tpu.memory_space<vmem>>, vector<16x128xbf16>
    tpu.vector_store %arg3[%c0_7, %c0_8], %18 {strides = array<i32>} : memref<16x128xbf16, #tpu.memory_space<vmem>>, vector<16x128xbf16>,
    return
  }
  func.func @transform_0(%arg0: i32) -> (i32, i32) {
    %c0_i32 = arith.constant 0 : i32
    %c0_i32_0 = arith.constant 0 : i32
    return %arg0, %c0_i32 : i32, i32
  }
  func.func @transform_1(%arg0: i32) -> (i32, i32) {
    %c0_i32 = arith.constant 0 : i32
    %c0_i32_0 = arith.constant 0 : i32
    %c0_i32_1 = arith.constant 0 : i32
    return %c0_i32, %c0_i32_0 : i32, i32
  }
  func.func @transform_2(%arg0: i32) -> (i32, i32) {
    %c0_i32 = arith.constant 0 : i32
    %c0_i32_0 = arith.constant 0 : i32
    return %arg0, %c0_i32 : i32, i32
  }
}

</mosaic_0001>

<llo_original>
// kernel: tpu_custom_call.1
$region0: #{tpu_custom_call.1}
  #allocation0 [shape = 'u32[]', space=smem, size = 0x4, offset = 0x4, fixed_abs, tag = 'smem constant byte address 0x4 - core index']
  #allocation1 [shape = 'u32[144,128]{1,0:T(1,128)}', space=vmem, size = 0x12000, scoped, tag = 'internal scratch']
  %s0 = inlined_call_operand.hbm [shape: bf16[16,128], index: 0, kind: input, shape index: {}]
  %s1 = inlined_call_operand.vmem [shape: bf16[1,128], index: 1, kind: input, shape index: {}]
  %s2 = inlined_call_operand.hbm [shape: bf16[16,128], index: 2, kind: output, shape index: {}]
  %s3 = sld [smem:[#allocation0]]
  $region22: #{tpu_custom_call.1} parent=0
    _
  %s5 = ssub.s32 1, %s3
  %s6 = scalar_select 0, %s5, %s3
  $region1: #{tpu_custom_call.1} parent=0
    #allocation2 [shape = 'u8[4096]{0}', space=vmem, size = 0x1000, scoped, tag = 'input window, operand 0, single buffered']
    #allocation3 [shape = 's32[1]{0}', space=sflag, size = 0x4, scoped, tag = 'scoped memory for tpu_custom_call.1']
    #allocation4 [shape = 's32[1]{0}', space=sflag, size = 0x4, scoped, tag = 'scoped memory for tpu_custom_call.1']
    #allocation5 [shape = 'u8[4096]{0}', space=vmem, size = 0x1000, scoped, tag = 'output window, operand 0, single buffered']
    %7 = vsyncpa [#allocation3], 0
    %8 = vsyncpa [#allocation4], 0
    // Predicated region
    $region2: #{tpu_custom_call.1} parent=1 // pred_check
      _
    $region3: #{tpu_custom_call.1} parent=1 // pred_check_branch
      %10 = sbr.rel (0) target = $region5
    $region4: #{tpu_custom_call.1} parent=1 // pred_region
      %s12 = ssub.s32 128, 128
      %13 = vsyncadd [#allocation3], %s12
      %s14 = sshll.u32 [#allocation2], 4
      %s15 = int_to_ptr.vmem [resolvable:$true] %s14
      %20 = dma.hbm_to_vmem [thread:$0]  %s0, 128, %s15, [#allocation3], 64, 64, 4
    $region5: #{tpu_custom_call.1} parent=1 // pred_fallthru
      _
    // Predicated region
    $region6: #{tpu_custom_call.1} parent=1 // pred_check
      _
    $region7: #{tpu_custom_call.1} parent=1 // pred_check_branch
      %22 = sbr.rel (0) target = $region9
    $region8: #{tpu_custom_call.1} parent=1 // pred_region
      _
    $region9: #{tpu_custom_call.1} parent=1 // pred_fallthru
      _
    // Predicated region
    $region10: #{tpu_custom_call.1} parent=1 // pred_check
      _
    $region11: #{tpu_custom_call.1} parent=1 // pred_check_branch
      %24 = sbr.rel (0) target = $region13
    $region12: #{tpu_custom_call.1} parent=1 // pred_region
      %25 = dma.done [#allocation3], 128
    $region13: #{tpu_custom_call.1} parent=1 // pred_fallthru
      _
    %v26 = vld [vmem:[#allocation2] sm:$0xf]
    %v27 = vld [vmem:[#allocation2 + $0x4] sm:$0xf]
    %v28 = vunpack.c.l.bf16 %v26
    %v29 = vunpack.c.l.bf16 %v27
    %v30 = vmul.f32 %v28, %v28
    %v31 = vmul.f32 %v29, %v29
    %32 = vadd.xlane.f32.xlu0 %v30
    %v33 = vpop.xlane.xlu0 %32
    %34 = vadd.xlane.f32.xlu0 %v31
    %v35 = vpop.xlane.xlu0 %34
    %v36 = vrcp.pop 128.0
    %v37 = vmul.f32 %v33, %v36
    %v38 = vmul.f32 %v35, %v36
    %v39 = vadd.f32 %v37, 1e-06
    %v40 = vadd.f32 %v38, 1e-06
    %v41 = vrsqrt.pop %v39
    %v42 = vrsqrt.pop %v40
    %v43 = vld [vmem:[%s1] sm:$0x1]
    %v44 = vunpack.c.l.bf16 %v43
    %v45 = vmul.f32 %v28, %v41
    %v46 = vmul.f32 %v29, %v42
    %v47 = vlaneseq
    %v48 = vshrl.u32 %v47, 7
    %v49 = vsub.s32 0, %v48
    %v50 = vrot.slane %v44, %v49
    %v51 = vmul.f32 %v50, %v45
    %v52 = vmul.f32 %v50, %v46
    %v53 = vpack.c.bf16 %v52, %v51
    %v55 = vunpack.c.l.b16 %v53
    %v56 = vunpack.c.h.b16 %v53
    %v57 = vpack.c.b16 %v55, %v55
    %v58 = vpack.c.b16 %v56, %v56
    %61 = vst [vmem:[#allocation5] sm:$0xf] %v57
    %62 = vst [vmem:[#allocation5 + $0x4] sm:$0xf] %v58
    // Predicated region
    $region14: #{tpu_custom_call.1} parent=1 // pred_check
      _
    $region15: #{tpu_custom_call.1} parent=1 // pred_check_branch
      %64 = sbr.rel (0) target = $region17
    $region16: #{tpu_custom_call.1} parent=1 // pred_region
      %s66 = ssub.s32 128, 128
      %67 = vsyncadd [#allocation4], %s66
      %s68 = sshll.u32 [#allocation5], 4
      %s69 = int_to_ptr.vmem [resolvable:$true] %s68
      %74 = dma.vmem_to_hbm [thread:$0]  %s69, 128, %s2, [#allocation4], 64, 64, 4
    $region17: #{tpu_custom_call.1} parent=1 // pred_fallthru
      _
    // Predicated region
    $region18: #{tpu_custom_call.1} parent=1 // pred_check
      _
    $region19: #{tpu_custom_call.1} parent=1 // pred_check_branch
      %76 = sbr.rel (0) target = $region21
    $region20: #{tpu_custom_call.1} parent=1 // pred_region
      %77 = dma.done [#allocation4], 128
    $region21: #{tpu_custom_call.1} parent=1 // pred_fallthru
      _
    %78 = vsyncpa [#allocation3], 1
    %79 = vsyncpa [#allocation4], 1

</llo_original>
